<compile_context>
chip_gen: v6e
topology: v6e:2x2x1
jax: 0.10.0
libtpu: 0.0.40
codegen_flags: <defaults>
</compile_context>

<pallas_src>
import jax
import jax.numpy as jnp
from jax import lax
from jax.experimental import pallas as pl
from jax.experimental.pallas import tpu as pltpu


def _round_up(n, m):
    return ((n + m - 1) // m) * m


def _make_mlp_kernel(num_layers):
    """Fused (Linear -> ReLU) x num_layers kernel.

    refs = (x_ref, w0_ref, b0_ref, w1_ref, b1_ref, ..., o_ref)
    Weights are stored transposed (Din_eff, Dout_eff); biases are (1, Dout_eff).
    The running activation stays in vregs/VMEM for the whole network; the
    final store writes only the true out_channels lanes.
    """

    def kernel(*refs):
        x_ref = refs[0]
        o_ref = refs[-1]
        h = x_ref[...]
        for i in range(num_layers):
            w = refs[1 + 2 * i][...]
            b = refs[2 + 2 * i][...]
            h = jnp.dot(h, w,
                        preferred_element_type=jnp.float32,
                        precision=lax.Precision.HIGHEST)
            h = jnp.maximum(h + b, 0.0)
        o_ref[...] = h.astype(o_ref.dtype)

    return kernel


def fused_mlp(x, padded_params, out_channels, batch_tile=256):
    """x: (B, Din) unpadded; padded_params: list of (w_t (Din_eff, Dout_eff), b (1, Dout_eff))."""
    B, Din = x.shape
    num_layers = len(padded_params)

    # Single full-array block for small batches; otherwise tile the batch dim.
    # (Last dims of blocks equal the full array extents -> exempt from the
    #  (8,128) divisibility rule; tb=256 is 8-aligned for the tiled case.)
    tb = B if B <= batch_tile else batch_tile
    grid = (pl.cdiv(B, tb),)

    flat_params = []
    in_specs = [pl.BlockSpec((tb, Din), lambda i: (i, 0))]
    for w_t, b_row in padded_params:
        flat_params.append(w_t)
        flat_params.append(b_row)
        # Constant block index -> Pallas keeps these VMEM-resident across the
        # batch grid (no re-fetch per step). Footprint here is a few KiB, far
        # under v7x's 32 MiB default scoped VMEM limit.
        in_specs.append(pl.BlockSpec(w_t.shape, lambda i: (0, 0)))
        in_specs.append(pl.BlockSpec(b_row.shape, lambda i: (0, 0)))

    return pl.pallas_call(
        _make_mlp_kernel(num_layers),
        out_shape=jax.ShapeDtypeStruct((B, out_channels), x.dtype),
        grid=grid,
        in_specs=in_specs,
        out_specs=pl.BlockSpec((tb, out_channels), lambda i: (i, 0)),
        compiler_params=pltpu.CompilerParams(
            dimension_semantics=("parallel",)),
    )(x, *flat_params)


class ModelGPallas:
    """JAX/Pallas port of the PyTorch ModelG module."""

    def __init__(self, channels, key):
        channels = list(channels)
        channels[0] = (channels[0] + 2) * 2 + 11
        self.channels = channels
        self.out_channels = channels[-1]

        self.params = []         # (w (Dout, Din), b (Dout,)) — nn.Linear layout, for the reference
        self.padded_params = []  # (w_t (Din_eff, Dout_eff), b (1, Dout_eff)) — kernel layout
        num_layers = len(channels) - 1
        prev_out_eff = None
        for li, (din, dout) in enumerate(zip(channels[:-1], channels[1:])):
            key, kw, kb = jax.random.split(key, 3)
            # Deterministic init matching nn.Linear's U(-1/sqrt(fan_in), 1/sqrt(fan_in))
            bound = 1.0 / (din ** 0.5)
            w = jax.random.uniform(kw, (dout, din), jnp.float32, -bound, bound)
            b = jax.random.uniform(kb, (dout,), jnp.float32, -bound, bound)
            self.params.append((w, b))

            # K dim: true width for layer 0 (no pad), else previous layer's
            # padded output width. N dim: 128-padded for hidden layers
            # (lane-dense intermediates), true width for the last layer so the
            # kernel can store the real output shape directly.
            din_eff = din if li == 0 else prev_out_eff
            is_last = (li == num_layers - 1)
            dout_eff = dout if is_last else _round_up(dout, 128)

            w_t_pad = jnp.zeros((din_eff, dout_eff), jnp.float32).at[:din, :dout].set(w.T)
            b_pad = jnp.zeros((1, dout_eff), jnp.float32).at[:, :dout].set(b)
            self.padded_params.append((w_t_pad, b_pad))
            prev_out_eff = dout_eff

        self._jit_forward = jax.jit(self._forward)

    def _forward(self, x, padded_params):
        return fused_mlp(x, padded_params, self.out_channels)

    def __call__(self, x):
        return self._jit_forward(x, self.padded_params)

    def reference(self, x):
        # Pure-JAX reference for correctness check (same matmul precision).
        for w, b in self.params:
            x = jnp.maximum(
                jnp.dot(x, w.T, precision=lax.Precision.HIGHEST) + b, 0.0)
        return x


if __name__ == "__main__":
    key = jax.random.PRNGKey(0)
    k_param, k_x = jax.random.split(key)

    # channels before __init__ transform; channels[0]=4 -> (4+2)*2+11 = 23 input features.
    channels = [4, 32, 16]
    model = ModelGPallas(channels, k_param)

    batch = 8
    in_features = model.channels[0]          # 23
    x = jax.random.normal(k_x, (batch, in_features), dtype=jnp.float32)

    out = model(x)
    out = jax.block_until_ready(out)

    ref = model.reference(x)
    assert out.shape == (batch, model.out_channels)
    assert jnp.allclose(out, ref, atol=1e-5, rtol=1e-5)

    print("KERNEL_OK")
</pallas_src>

<mosaic_0001>
module attributes {stable_mosaic.version = 11 : i64} {
  func.func @kernel(%arg0: i32, %arg1: memref<8x23xf32, #tpu.memory_space<vmem>>, %arg2: memref<23x128xf32, #tpu.memory_space<vmem>>, %arg3: memref<1x128xf32, #tpu.memory_space<vmem>>, %arg4: memref<128x16xf32, #tpu.memory_space<vmem>>, %arg5: memref<1x16xf32, #tpu.memory_space<vmem>>, %arg6: memref<8x16xf32, #tpu.memory_space<vmem>>) attributes {dimension_semantics = [#tpu.dimension_semantics<parallel>], iteration_bounds = array<i64: 1>, scalar_prefetch = 0 : i64, scratch_operands = 0 : i64, tpu.core_type = #tpu.core_type<tc>, window_params = [{transform_indices = @transform_0, window_bounds = array<i64: 8, 23>}, {pipeline_mode = #tpu.pipeline_mode<synchronous>, transform_indices = @transform_1, window_bounds = array<i64: 23, 128>}, {pipeline_mode = #tpu.pipeline_mode<synchronous>, transform_indices = @transform_2, window_bounds = array<i64: 1, 128>}, {pipeline_mode = #tpu.pipeline_mode<synchronous>, transform_indices = @transform_3, window_bounds = array<i64: 128, 16>}, {pipeline_mode = #tpu.pipeline_mode<synchronous>, transform_indices = @transform_4, window_bounds = array<i64: 1, 16>}, {transform_indices = @transform_5, window_bounds = array<i64: 8, 16>}]} {
    %c0 = arith.constant 0 : index
    %c0_0 = arith.constant 0 : index
    %0 = vector.load %arg1[%c0, %c0_0] : memref<8x23xf32, #tpu.memory_space<vmem>>, vector<8x23xf32>
    %c0_1 = arith.constant 0 : index
    %c0_2 = arith.constant 0 : index
    %1 = vector.load %arg2[%c0_1, %c0_2] : memref<23x128xf32, #tpu.memory_space<vmem>>, vector<23x128xf32>
    %c0_3 = arith.constant 0 : index
    %c0_4 = arith.constant 0 : index
    %2 = vector.load %arg3[%c0_3, %c0_4] : memref<1x128xf32, #tpu.memory_space<vmem>>, vector<1x128xf32>
    %cst = arith.constant dense<0.000000e+00> : vector<8x128xf32>
    %3 = tpu.matmul %0, %1, %cst {dimension_numbers = #tpu.dot_dimension_numbers<[1], [0], [0], [1], [0, 0, 1, 1], [], []>, precision = #tpu.contract_precision<fp32>} : vector<8x23xf32>, vector<23x128xf32>, vector<8x128xf32> -> vector<8x128xf32>
    %4 = vector.broadcast %2 : vector<1x128xf32> to vector<8x128xf32>
    %5 = arith.addf %3, %4 : vector<8x128xf32>
    %cst_5 = arith.constant 0.000000e+00 : f32
    %6 = vector.broadcast %cst_5 : f32 to vector<8x128xf32>
    %7 = arith.maximumf %5, %6 : vector<8x128xf32>
    %c0_6 = arith.constant 0 : index
    %c0_7 = arith.constant 0 : index
    %8 = vector.load %arg4[%c0_6, %c0_7] : memref<128x16xf32, #tpu.memory_space<vmem>>, vector<128x16xf32>
    %c0_8 = arith.constant 0 : index
    %c0_9 = arith.constant 0 : index
    %9 = vector.load %arg5[%c0_8, %c0_9] : memref<1x16xf32, #tpu.memory_space<vmem>>, vector<1x16xf32>
    %cst_10 = arith.constant dense<0.000000e+00> : vector<8x16xf32>
    %10 = tpu.matmul %7, %8, %cst_10 {dimension_numbers = #tpu.dot_dimension_numbers<[1], [0], [0], [1], [0, 0, 1, 1], [], []>, precision = #tpu.contract_precision<fp32>} : vector<8x128xf32>, vector<128x16xf32>, vector<8x16xf32> -> vector<8x16xf32>
    %11 = vector.broadcast %9 : vector<1x16xf32> to vector<8x16xf32>
    %12 = arith.addf %10, %11 : vector<8x16xf32>
    %cst_11 = arith.constant 0.000000e+00 : f32
    %13 = vector.broadcast %cst_11 : f32 to vector<8x16xf32>
    %14 = arith.maximumf %12, %13 : vector<8x16xf32>
    %c0_12 = arith.constant 0 : index
    %c0_13 = arith.constant 0 : index
    %15 = vector.load %arg6[%c0_12, %c0_13] : memref<8x16xf32, #tpu.memory_space<vmem>>, vector<8x16xf32>
    tpu.vector_store %arg6[%c0_12, %c0_13], %14 {strides = array<i32>} : memref<8x16xf32, #tpu.memory_space<vmem>>, vector<8x16xf32>,
    return
  }
  func.func @transform_0(%arg0: i32) -> (i32, i32) {
    %c0_i32 = arith.constant 0 : i32
    %c0_i32_0 = arith.constant 0 : i32
    return %arg0, %c0_i32 : i32, i32
  }
  func.func @transform_1(%arg0: i32) -> (i32, i32) {
    %c0_i32 = arith.constant 0 : i32
    %c0_i32_0 = arith.constant 0 : i32
    %c0_i32_1 = arith.constant 0 : i32
    return %c0_i32, %c0_i32_0 : i32, i32
  }
  func.func @transform_2(%arg0: i32) -> (i32, i32) {
    %c0_i32 = arith.constant 0 : i32
    %c0_i32_0 = arith.constant 0 : i32
    %c0_i32_1 = arith.constant 0 : i32
    return %c0_i32, %c0_i32_0 : i32, i32
  }
  func.func @transform_3(%arg0: i32) -> (i32, i32) {
    %c0_i32 = arith.constant 0 : i32
    %c0_i32_0 = arith.constant 0 : i32
    %c0_i32_1 = arith.constant 0 : i32
    return %c0_i32, %c0_i32_0 : i32, i32
  }
  func.func @transform_4(%arg0: i32) -> (i32, i32) {
    %c0_i32 = arith.constant 0 : i32
    %c0_i32_0 = arith.constant 0 : i32
    %c0_i32_1 = arith.constant 0 : i32
    return %c0_i32, %c0_i32_0 : i32, i32
  }
  func.func @transform_5(%arg0: i32) -> (i32, i32) {
    %c0_i32 = arith.constant 0 : i32
    %c0_i32_0 = arith.constant 0 : i32
    return %arg0, %c0_i32 : i32, i32
  }
}

</mosaic_0001>

<llo_original>
// kernel: _forward.1
$region0: #{_forward.1}
  #allocation0 [shape = 'u32[]', space=smem, size = 0x4, offset = 0x4, fixed_abs, tag = 'smem constant byte address 0x4 - core index']
  #allocation1 [shape = 'u32[144,128]{1,0:T(1,128)}', space=vmem, size = 0x12000, scoped, tag = 'internal scratch']
  %s0 = inlined_call_operand.vmem [shape: f32[8,23], index: 0, kind: input, shape index: {}]
  %s1 = inlined_call_operand.vmem [shape: f32[23,128], index: 1, kind: input, shape index: {}]
  %s2 = inlined_call_operand.vmem [shape: f32[1,128], index: 2, kind: input, shape index: {}]
  %s3 = inlined_call_operand.vmem [shape: f32[128,16], index: 3, kind: input, shape index: {}]
  %s4 = inlined_call_operand.vmem [shape: f32[1,16], index: 4, kind: input, shape index: {}]
  %s5 = inlined_call_operand.hbm [shape: f32[8,16], index: 5, kind: output, shape index: {}]
  %s6 = sld [smem:[#allocation0]]
  $region30: #{_forward.1} parent=0
    _
  %s8 = ssub.s32 1, %s6
  %s9 = scalar_select 0, %s8, %s6
  $region1: #{_forward.1} parent=0
    #allocation2 [shape = 'u8[4096]{0}', space=vmem, size = 0x1000, scoped, tag = 'output window, operand 0, single buffered']
    #allocation3 [shape = 's32[1]{0}', space=sflag, size = 0x4, scoped, tag = 'scoped memory for _forward.1']
    %10 = vsyncpa [#allocation3], 0
    // Predicated region
    $region2: #{_forward.1} parent=1 // pred_check
      _
    $region3: #{_forward.1} parent=1 // pred_check_branch
      %12 = sbr.rel (0) target = $region5
    $region4: #{_forward.1} parent=1 // pred_region
      _
    $region5: #{_forward.1} parent=1 // pred_fallthru
      _
    // Predicated region
    $region6: #{_forward.1} parent=1 // pred_check
      _
    $region7: #{_forward.1} parent=1 // pred_check_branch
      %14 = sbr.rel (0) target = $region9
    $region8: #{_forward.1} parent=1 // pred_region
      _
    $region9: #{_forward.1} parent=1 // pred_fallthru
      _
    // Predicated region
    $region10: #{_forward.1} parent=1 // pred_check
      _
    $region11: #{_forward.1} parent=1 // pred_check_branch
      %16 = sbr.rel (0) target = $region13
    $region12: #{_forward.1} parent=1 // pred_region
      _
    $region13: #{_forward.1} parent=1 // pred_fallthru
      _
    // Predicated region
    $region14: #{_forward.1} parent=1 // pred_check
      _
    $region15: #{_forward.1} parent=1 // pred_check_branch
      %18 = sbr.rel (0) target = $region17
    $region16: #{_forward.1} parent=1 // pred_region
      _
    $region17: #{_forward.1} parent=1 // pred_fallthru
      _
    // Predicated region
    $region18: #{_forward.1} parent=1 // pred_check
      _
    $region19: #{_forward.1} parent=1 // pred_check_branch
      %20 = sbr.rel (0) target = $region21
    $region20: #{_forward.1} parent=1 // pred_region
      _
    $region21: #{_forward.1} parent=1 // pred_fallthru
      _
    %v21 = vld [vmem:[%s0] sm:$0xff]
    %v22 = vld [vmem:[%s1] sm:$0xff]
    %v23 = vld [vmem:[%s1 + $0x8] sm:$0xff]
    %v24 = vld [vmem:[%s1 + $0x10] sm:$0x7f]
    %v25 = vld [vmem:[%s2] sm:$0x1]
    %v27 = vlaneseq
    %v28 = vshrl.u32 %v27, 7
    %v29 = vsub.s32 0, %v28
    %v30 = vrot.slane %v25, %v29
    %vm32 = vcmask 187392
    %v34 = vsel %vm32, %v21, 0
    %vm36 = vcmask 1046528
    %v38 = vsel %vm36, %v24, 0
    %40 = vmatprep.subr.mxu0 0.0
    %41 = vmatpush1.msra.mxu0 0.0
    %42 = vmatprep.subr.mxu0 0.0
    %43 = vmatpush1.msra.mxu0 0.0
    %44 = vmatprep.subr.mxu0 0.0
    %45 = vmatpush1.msra.mxu0 0.0
    %46 = vmatprep.subr.mxu0 0.0
    %47 = vmatpush1.msra.mxu0 0.0
    %48 = vmatprep.subr.mxu0 0.0
    %49 = vmatpush1.msra.mxu0 0.0
    %50 = vmatprep.subr.mxu0 0.0
    %51 = vmatpush1.msra.mxu0 0.0
    %52 = vmatprep.subr.mxu0 0.0
    %53 = vmatpush1.msra.mxu0 0.0
    %54 = vmatprep.subr.mxu0 0.0
    %55 = vmatpush1.msra.mxu0 0.0
    %56 = vmatprep.subr.mxu0 0.0
    %57 = vmatpush1.msra.mxu0 0.0
    %58 = vmatprep.subr.mxu0 0.0
    %59 = vmatpush1.msra.mxu0 0.0
    %60 = vmatprep.subr.mxu0 0.0
    %61 = vmatpush1.msra.mxu0 0.0
    %62 = vmatprep.subr.mxu0 0.0
    %63 = vmatpush1.msra.mxu0 0.0
    %64 = vmatprep.subr.mxu0 0.0
    %65 = vmatpush1.msra.mxu0 0.0
    %66 = vmatprep.subr.mxu0 0.0
    %v67 = vand.u32 %v38, 4294901760
    %68 = vmatpush1.msra.mxu0 %v67
    %69 = vmatprep.subr.mxu0 0.0
    %v70 = vand.u32 %v23, 4294901760
    %71 = vmatpush1.msra.mxu0 %v70
    %72 = vmatprep.subr.mxu0 0.0
    %v73 = vand.u32 %v22, 4294901760
    %74 = vmatpush1.msra.mxu0 %v73
    %75 = vmatprep.subr.mxu0 0.0
    %76 = vmatpush2.msra.mxu0 0.0
    %77 = vmatprep.subr.mxu0 0.0
    %78 = vmatpush2.msra.mxu0 0.0
    %79 = vmatprep.subr.mxu0 0.0
    %80 = vmatpush2.msra.mxu0 0.0
    %81 = vmatprep.subr.mxu0 0.0
    %82 = vmatpush2.msra.mxu0 0.0
    %83 = vmatprep.subr.mxu0 0.0
    %84 = vmatpush2.msra.mxu0 0.0
    %85 = vmatprep.subr.mxu0 0.0
    %86 = vmatpush2.msra.mxu0 0.0
    %87 = vmatprep.subr.mxu0 0.0
    %88 = vmatpush2.msra.mxu0 0.0
    %89 = vmatprep.subr.mxu0 0.0
    %90 = vmatpush2.msra.mxu0 0.0
    %91 = vmatprep.subr.mxu0 0.0
    %92 = vmatpush2.msra.mxu0 0.0
    %93 = vmatprep.subr.mxu0 0.0
    %94 = vmatpush2.msra.mxu0 0.0
    %95 = vmatprep.subr.mxu0 0.0
    %96 = vmatpush2.msra.mxu0 0.0
    %97 = vmatprep.subr.mxu0 0.0
    %98 = vmatpush2.msra.mxu0 0.0
    %99 = vmatprep.subr.mxu0 0.0
    %100 = vmatpush2.msra.mxu0 0.0
    %101 = vmatprep.subr.mxu0 0.0
    %102 = vmatpush2.msra.mxu0 0.0
    %103 = vmatprep.subr.mxu0 0.0
    %104 = vmatpush2.msra.mxu0 0.0
    %105 = vmatprep.subr.mxu0 0.0
    %106 = vmatpush2.msra.mxu0 0.0
    %107 = vmatprep.mubr.f32.mxu0 0.0
    %v108 = vand.u32 %v34, 4294901760
    %v109 = vsub.f32 %v34, %v108
    %v110 = vand.u32 %v109, 4294901760
    %v111 = vsub.f32 %v109, %v110
    %v112 = vand.u32 %v111, 4294901760
    %113 = vmatmul.mubr.f32.gmra.mxu0 %v112
    %v114 = vpop.f32.mrf.mxu0
    %v115 = vadd.f32 %v30, %v114
    %v116 = vpop.f32.mrf.mxu0
    %117 = vdwg.mxu0
    %118 = vmatprep.subr.mxu0 0.0
    %119 = vmatpush1.msra.mxu0 0.0
    %120 = vmatprep.subr.mxu0 0.0
    %121 = vmatpush1.msra.mxu0 0.0
    %122 = vmatprep.subr.mxu0 0.0
    %123 = vmatpush1.msra.mxu0 0.0
    %124 = vmatprep.subr.mxu0 0.0
    %125 = vmatpush1.msra.mxu0 0.0
    %126 = vmatprep.subr.mxu0 0.0
    %127 = vmatpush1.msra.mxu0 0.0
    %128 = vmatprep.subr.mxu0 0.0
    %129 = vmatpush1.msra.mxu0 0.0
    %130 = vmatprep.subr.mxu0 0.0
    %131 = vmatpush1.msra.mxu0 0.0
    %132 = vmatprep.subr.mxu0 0.0
    %133 = vmatpush1.msra.mxu0 0.0
    %134 = vmatprep.subr.mxu0 0.0
    %135 = vmatpush1.msra.mxu0 0.0
    %136 = vmatprep.subr.mxu0 0.0
    %137 = vmatpush1.msra.mxu0 0.0
    %138 = vmatprep.subr.mxu0 0.0
    %139 = vmatpush1.msra.mxu0 0.0
    %140 = vmatprep.subr.mxu0 0.0
    %141 = vmatpush1.msra.mxu0 0.0
    %142 = vmatprep.subr.mxu0 0.0
    %143 = vmatpush1.msra.mxu0 0.0
    %144 = vmatprep.subr.mxu0 0.0
    %v145 = vand.u32 %v38, 4294901760
    %v146 = vsub.f32 %v38, %v145
    %v147 = vand.u32 %v146, 4294901760
    %v148 = vsub.f32 %v146, %v147
    %v149 = vand.u32 %v148, 4294901760
    %150 = vmatpush1.msra.mxu0 %v149
    %151 = vmatprep.subr.mxu0 0.0
    %v152 = vand.u32 %v23, 4294901760
    %v153 = vsub.f32 %v23, %v152
    %v154 = vand.u32 %v153, 4294901760
    %v155 = vsub.f32 %v153, %v154
    %v156 = vand.u32 %v155, 4294901760
    %157 = vmatpush1.msra.mxu0 %v156
    %158 = vmatprep.subr.mxu0 0.0
    %v159 = vand.u32 %v22, 4294901760
    %v160 = vsub.f32 %v22, %v159
    %v161 = vand.u32 %v160, 4294901760
    %v162 = vsub.f32 %v160, %v161
    %v163 = vand.u32 %v162, 4294901760
    %164 = vmatpush1.msra.mxu0 %v163
    %165 = vmatprep.subr.mxu0 0.0
    %166 = vmatpush2.msra.mxu0 0.0
    %167 = vmatprep.subr.mxu0 0.0
    %168 = vmatpush2.msra.mxu0 0.0
    %169 = vmatprep.subr.mxu0 0.0
    %170 = vmatpush2.msra.mxu0 0.0
    %171 = vmatprep.subr.mxu0 0.0
    %172 = vmatpush2.msra.mxu0 0.0
    %173 = vmatprep.subr.mxu0 0.0
    %174 = vmatpush2.msra.mxu0 0.0
    %175 = vmatprep.subr.mxu0 0.0
    %176 = vmatpush2.msra.mxu0 0.0
    %177 = vmatprep.subr.mxu0 0.0
    %178 = vmatpush2.msra.mxu0 0.0
    %179 = vmatprep.subr.mxu0 0.0
    %180 = vmatpush2.msra.mxu0 0.0
    %181 = vmatprep.subr.mxu0 0.0
    %182 = vmatpush2.msra.mxu0 0.0
    %183 = vmatprep.subr.mxu0 0.0
    %184 = vmatpush2.msra.mxu0 0.0
    %185 = vmatprep.subr.mxu0 0.0
    %186 = vmatpush2.msra.mxu0 0.0
    %187 = vmatprep.subr.mxu0 0.0
    %188 = vmatpush2.msra.mxu0 0.0
    %189 = vmatprep.subr.mxu0 0.0
    %190 = vmatpush2.msra.mxu0 0.0
    %191 = vmatprep.subr.mxu0 0.0
    %192 = vmatpush2.msra.mxu0 0.0
    %193 = vmatprep.subr.mxu0 0.0
    %194 = vmatpush2.msra.mxu0 0.0
    %195 = vmatprep.subr.mxu0 0.0
    %196 = vmatpush2.msra.mxu0 0.0
    %197 = vmatprep.mubr.f32.mxu0 0.0
    %v198 = vand.u32 %v34, 4294901760
    %199 = vmatmul.mubr.f32.gmra.mxu0 %v198
    %v200 = vpop.f32.mrf.mxu0
    %v201 = vadd.f32 %v115, %v200
    %v202 = vpop.f32.mrf.mxu0
    %203 = vdwg.mxu0
    %204 = vmatprep.subr.mxu0 0.0
    %205 = vmatpush1.msra.mxu0 0.0
    %206 = vmatprep.subr.mxu0 0.0
    %207 = vmatpush1.msra.mxu0 0.0
    %208 = vmatprep.subr.mxu0 0.0
    %209 = vmatpush1.msra.mxu0 0.0
    %210 = vmatprep.subr.mxu0 0.0
    %211 = vmatpush1.msra.mxu0 0.0
    %212 = vmatprep.subr.mxu0 0.0
    %213 = vmatpush1.msra.mxu0 0.0
    %214 = vmatprep.subr.mxu0 0.0
    %215 = vmatpush1.msra.mxu0 0.0
    %216 = vmatprep.subr.mxu0 0.0
    %217 = vmatpush1.msra.mxu0 0.0
    %218 = vmatprep.subr.mxu0 0.0
    %219 = vmatpush1.msra.mxu0 0.0
    %220 = vmatprep.subr.mxu0 0.0
    %221 = vmatpush1.msra.mxu0 0.0
    %222 = vmatprep.subr.mxu0 0.0
    %223 = vmatpush1.msra.mxu0 0.0
    %224 = vmatprep.subr.mxu0 0.0
    %225 = vmatpush1.msra.mxu0 0.0
    %226 = vmatprep.subr.mxu0 0.0
    %227 = vmatpush1.msra.mxu0 0.0
    %228 = vmatprep.subr.mxu0 0.0
    %229 = vmatpush1.msra.mxu0 0.0
    %230 = vmatprep.subr.mxu0 0.0
    %v231 = vand.u32 %v38, 4294901760
    %v232 = vsub.f32 %v38, %v231
    %233 = vmatpush1.msra.mxu0 %v232
    %234 = vmatprep.subr.mxu0 0.0
    %v235 = vand.u32 %v23, 4294901760
    %v236 = vsub.f32 %v23, %v235
    %237 = vmatpush1.msra.mxu0 %v236
    %238 = vmatprep.subr.mxu0 0.0
    %v239 = vand.u32 %v22, 4294901760
    %v240 = vsub.f32 %v22, %v239
    %241 = vmatpush1.msra.mxu0 %v240
    %242 = vmatprep.subr.mxu0 0.0
    %243 = vmatpush2.msra.mxu0 0.0
    %244 = vmatprep.subr.mxu0 0.0
    %245 = vmatpush2.msra.mxu0 0.0
    %246 = vmatprep.subr.mxu0 0.0
    %247 = vmatpush2.msra.mxu0 0.0
    %248 = vmatprep.subr.mxu0 0.0
    %249 = vmatpush2.msra.mxu0 0.0
    %250 = vmatprep.subr.mxu0 0.0
    %251 = vmatpush2.msra.mxu0 0.0
    %252 = vmatprep.subr.mxu0 0.0
    %253 = vmatpush2.msra.mxu0 0.0
    %254 = vmatprep.subr.mxu0 0.0
    %255 = vmatpush2.msra.mxu0 0.0
    %256 = vmatprep.subr.mxu0 0.0
    %257 = vmatpush2.msra.mxu0 0.0
    %258 = vmatprep.subr.mxu0 0.0
    %259 = vmatpush2.msra.mxu0 0.0
    %260 = vmatprep.subr.mxu0 0.0
    %261 = vmatpush2.msra.mxu0 0.0
    %262 = vmatprep.subr.mxu0 0.0
    %263 = vmatpush2.msra.mxu0 0.0
    %264 = vmatprep.subr.mxu0 0.0
    %265 = vmatpush2.msra.mxu0 0.0
    %266 = vmatprep.subr.mxu0 0.0
    %267 = vmatpush2.msra.mxu0 0.0
    %268 = vmatprep.subr.mxu0 0.0
    %269 = vmatpush2.msra.mxu0 0.0
    %270 = vmatprep.subr.mxu0 0.0
    %271 = vmatpush2.msra.mxu0 0.0
    %272 = vmatprep.subr.mxu0 0.0
    %273 = vmatpush2.msra.mxu0 0.0
    %274 = vmatprep.mubr.f32.mxu0 0.0
    %v275 = vand.u32 %v34, 4294901760
    %v276 = vsub.f32 %v34, %v275
    %277 = vmatmul.mubr.f32.gmra.mxu0 %v276
    %v278 = vpop.f32.mrf.mxu0
    %v279 = vadd.f32 %v201, %v278
    %v280 = vpop.f32.mrf.mxu0
    %281 = vdwg.mxu0
    %282 = vmatprep.subr.mxu0 0.0
    %283 = vmatpush1.msra.mxu0 0.0
    %284 = vmatprep.subr.mxu0 0.0
    %285 = vmatpush1.msra.mxu0 0.0
    %286 = vmatprep.subr.mxu0 0.0
    %287 = vmatpush1.msra.mxu0 0.0
    %288 = vmatprep.subr.mxu0 0.0
    %289 = vmatpush1.msra.mxu0 0.0
    %290 = vmatprep.subr.mxu0 0.0
    %291 = vmatpush1.msra.mxu0 0.0
    %292 = vmatprep.subr.mxu0 0.0
    %293 = vmatpush1.msra.mxu0 0.0
    %294 = vmatprep.subr.mxu0 0.0
    %295 = vmatpush1.msra.mxu0 0.0
    %296 = vmatprep.subr.mxu0 0.0
    %297 = vmatpush1.msra.mxu0 0.0
    %298 = vmatprep.subr.mxu0 0.0
    %299 = vmatpush1.msra.mxu0 0.0
    %300 = vmatprep.subr.mxu0 0.0
    %301 = vmatpush1.msra.mxu0 0.0
    %302 = vmatprep.subr.mxu0 0.0
    %303 = vmatpush1.msra.mxu0 0.0
    %304 = vmatprep.subr.mxu0 0.0
    %305 = vmatpush1.msra.mxu0 0.0
    %306 = vmatprep.subr.mxu0 0.0
    %307 = vmatpush1.msra.mxu0 0.0
    %308 = vmatprep.subr.mxu0 0.0
    %v309 = vand.u32 %v38, 4294901760
    %310 = vmatpush1.msra.mxu0 %v309
    %311 = vmatprep.subr.mxu0 0.0
    %v312 = vand.u32 %v23, 4294901760
    %313 = vmatpush1.msra.mxu0 %v312
    %314 = vmatprep.subr.mxu0 0.0
    %v315 = vand.u32 %v22, 4294901760
    %316 = vmatpush1.msra.mxu0 %v315
    %317 = vmatprep.subr.mxu0 0.0
    %318 = vmatpush2.msra.mxu0 0.0
    %319 = vmatprep.subr.mxu0 0.0
    %320 = vmatpush2.msra.mxu0 0.0
    %321 = vmatprep.subr.mxu0 0.0
    %322 = vmatpush2.msra.mxu0 0.0
    %323 = vmatprep.subr.mxu0 0.0
    %324 = vmatpush2.msra.mxu0 0.0
    %325 = vmatprep.subr.mxu0 0.0
    %326 = vmatpush2.msra.mxu0 0.0
    %327 = vmatprep.subr.mxu0 0.0
    %328 = vmatpush2.msra.mxu0 0.0
    %329 = vmatprep.subr.mxu0 0.0
    %330 = vmatpush2.msra.mxu0 0.0
    %331 = vmatprep.subr.mxu0 0.0
    %332 = vmatpush2.msra.mxu0 0.0
    %333 = vmatprep.subr.mxu0 0.0
    %334 = vmatpush2.msra.mxu0 0.0
    %335 = vmatprep.subr.mxu0 0.0
    %336 = vmatpush2.msra.mxu0 0.0
    %337 = vmatprep.subr.mxu0 0.0
    %338 = vmatpush2.msra.mxu0 0.0
    %339 = vmatprep.subr.mxu0 0.0
    %340 = vmatpush2.msra.mxu0 0.0
    %341 = vmatprep.subr.mxu0 0.0
    %342 = vmatpush2.msra.mxu0 0.0
    %343 = vmatprep.subr.mxu0 0.0
    %344 = vmatpush2.msra.mxu0 0.0
    %345 = vmatprep.subr.mxu0 0.0
    %346 = vmatpush2.msra.mxu0 0.0
    %347 = vmatprep.subr.mxu0 0.0
    %348 = vmatpush2.msra.mxu0 0.0
    %349 = vmatprep.mubr.f32.mxu0 0.0
    %v350 = vand.u32 %v34, 4294901760
    %v351 = vsub.f32 %v34, %v350
    %v352 = vand.u32 %v351, 4294901760
    %353 = vmatmul.mubr.f32.gmra.mxu0 %v352
    %v354 = vpop.f32.mrf.mxu0
    %v355 = vadd.f32 %v279, %v354
    %v356 = vpop.f32.mrf.mxu0
    %357 = vdwg.mxu0
    %358 = vmatprep.subr.mxu0 0.0
    %359 = vmatpush1.msra.mxu0 0.0
    %360 = vmatprep.subr.mxu0 0.0
    %361 = vmatpush1.msra.mxu0 0.0
    %362 = vmatprep.subr.mxu0 0.0
    %363 = vmatpush1.msra.mxu0 0.0
    %364 = vmatprep.subr.mxu0 0.0
    %365 = vmatpush1.msra.mxu0 0.0
    %366 = vmatprep.subr.mxu0 0.0
    %367 = vmatpush1.msra.mxu0 0.0
    %368 = vmatprep.subr.mxu0 0.0
    %369 = vmatpush1.msra.mxu0 0.0
    %370 = vmatprep.subr.mxu0 0.0
    %371 = vmatpush1.msra.mxu0 0.0
    %372 = vmatprep.subr.mxu0 0.0
    %373 = vmatpush1.msra.mxu0 0.0
    %374 = vmatprep.subr.mxu0 0.0
    %375 = vmatpush1.msra.mxu0 0.0
    %376 = vmatprep.subr.mxu0 0.0
    %377 = vmatpush1.msra.mxu0 0.0
    %378 = vmatprep.subr.mxu0 0.0
    %379 = vmatpush1.msra.mxu0 0.0
    %380 = vmatprep.subr.mxu0 0.0
    %381 = vmatpush1.msra.mxu0 0.0
    %382 = vmatprep.subr.mxu0 0.0
    %383 = vmatpush1.msra.mxu0 0.0
    %384 = vmatprep.subr.mxu0 0.0
    %v385 = vand.u32 %v38, 4294901760
    %v386 = vsub.f32 %v38, %v385
    %v387 = vand.u32 %v386, 4294901760
    %388 = vmatpush1.msra.mxu0 %v387
    %389 = vmatprep.subr.mxu0 0.0
    %v390 = vand.u32 %v23, 4294901760
    %v391 = vsub.f32 %v23, %v390
    %v392 = vand.u32 %v391, 4294901760
    %393 = vmatpush1.msra.mxu0 %v392
    %394 = vmatprep.subr.mxu0 0.0
    %v395 = vand.u32 %v22, 4294901760
    %v396 = vsub.f32 %v22, %v395
    %v397 = vand.u32 %v396, 4294901760
    %398 = vmatpush1.msra.mxu0 %v397
    %399 = vmatprep.subr.mxu0 0.0
    %400 = vmatpush2.msra.mxu0 0.0
    %401 = vmatprep.subr.mxu0 0.0
    %402 = vmatpush2.msra.mxu0 0.0
    %403 = vmatprep.subr.mxu0 0.0
    %404 = vmatpush2.msra.mxu0 0.0
    %405 = vmatprep.subr.mxu0 0.0
    %406 = vmatpush2.msra.mxu0 0.0
    %407 = vmatprep.subr.mxu0 0.0
    %408 = vmatpush2.msra.mxu0 0.0
    %409 = vmatprep.subr.mxu0 0.0
    %410 = vmatpush2.msra.mxu0 0.0
    %411 = vmatprep.subr.mxu0 0.0
    %412 = vmatpush2.msra.mxu0 0.0
    %413 = vmatprep.subr.mxu0 0.0
    %414 = vmatpush2.msra.mxu0 0.0
    %415 = vmatprep.subr.mxu0 0.0
    %416 = vmatpush2.msra.mxu0 0.0
    %417 = vmatprep.subr.mxu0 0.0
    %418 = vmatpush2.msra.mxu0 0.0
    %419 = vmatprep.subr.mxu0 0.0
    %420 = vmatpush2.msra.mxu0 0.0
    %421 = vmatprep.subr.mxu0 0.0
    %422 = vmatpush2.msra.mxu0 0.0
    %423 = vmatprep.subr.mxu0 0.0
    %424 = vmatpush2.msra.mxu0 0.0
    %425 = vmatprep.subr.mxu0 0.0
    %426 = vmatpush2.msra.mxu0 0.0
    %427 = vmatprep.subr.mxu0 0.0
    %428 = vmatpush2.msra.mxu0 0.0
    %429 = vmatprep.subr.mxu0 0.0
    %430 = vmatpush2.msra.mxu0 0.0
    %431 = vmatprep.mubr.f32.mxu0 0.0
    %v432 = vand.u32 %v34, 4294901760
    %433 = vmatmul.mubr.f32.gmra.mxu0 %v432
    %v434 = vpop.f32.mrf.mxu0
    %v435 = vadd.f32 %v355, %v434
    %v436 = vpop.f32.mrf.mxu0
    %437 = vdwg.mxu0
    %438 = vmatprep.subr.mxu0 0.0
    %439 = vmatpush1.msra.mxu0 0.0
    %440 = vmatprep.subr.mxu0 0.0
    %441 = vmatpush1.msra.mxu0 0.0
    %442 = vmatprep.subr.mxu0 0.0
    %443 = vmatpush1.msra.mxu0 0.0
    %444 = vmatprep.subr.mxu0 0.0
    %445 = vmatpush1.msra.mxu0 0.0
    %446 = vmatprep.subr.mxu0 0.0
    %447 = vmatpush1.msra.mxu0 0.0
    %448 = vmatprep.subr.mxu0 0.0
    %449 = vmatpush1.msra.mxu0 0.0
    %450 = vmatprep.subr.mxu0 0.0
    %451 = vmatpush1.msra.mxu0 0.0
    %452 = vmatprep.subr.mxu0 0.0
    %453 = vmatpush1.msra.mxu0 0.0
    %454 = vmatprep.subr.mxu0 0.0
    %455 = vmatpush1.msra.mxu0 0.0
    %456 = vmatprep.subr.mxu0 0.0
    %457 = vmatpush1.msra.mxu0 0.0
    %458 = vmatprep.subr.mxu0 0.0
    %459 = vmatpush1.msra.mxu0 0.0
    %460 = vmatprep.subr.mxu0 0.0
    %461 = vmatpush1.msra.mxu0 0.0
    %462 = vmatprep.subr.mxu0 0.0
    %463 = vmatpush1.msra.mxu0 0.0
    %464 = vmatprep.subr.mxu0 0.0
    %v465 = vand.u32 %v38, 4294901760
    %466 = vmatpush1.msra.mxu0 %v465
    %467 = vmatprep.subr.mxu0 0.0
    %v468 = vand.u32 %v23, 4294901760
    %469 = vmatpush1.msra.mxu0 %v468
    %470 = vmatprep.subr.mxu0 0.0
    %v471 = vand.u32 %v22, 4294901760
    %472 = vmatpush1.msra.mxu0 %v471
    %473 = vmatprep.subr.mxu0 0.0
    %474 = vmatpush2.msra.mxu0 0.0
    %475 = vmatprep.subr.mxu0 0.0
    %476 = vmatpush2.msra.mxu0 0.0
    %477 = vmatprep.subr.mxu0 0.0
    %478 = vmatpush2.msra.mxu0 0.0
    %479 = vmatprep.subr.mxu0 0.0
    %480 = vmatpush2.msra.mxu0 0.0
    %481 = vmatprep.subr.mxu0 0.0
    %482 = vmatpush2.msra.mxu0 0.0
    %483 = vmatprep.subr.mxu0 0.0
    %484 = vmatpush2.msra.mxu0 0.0
    %485 = vmatprep.subr.mxu0 0.0
    %486 = vmatpush2.msra.mxu0 0.0
    %487 = vmatprep.subr.mxu0 0.0
    %488 = vmatpush2.msra.mxu0 0.0
    %489 = vmatprep.subr.mxu0 0.0
    %490 = vmatpush2.msra.mxu0 0.0
    %491 = vmatprep.subr.mxu0 0.0
    %492 = vmatpush2.msra.mxu0 0.0
    %493 = vmatprep.subr.mxu0 0.0
    %494 = vmatpush2.msra.mxu0 0.0
    %495 = vmatprep.subr.mxu0 0.0
    %496 = vmatpush2.msra.mxu0 0.0
    %497 = vmatprep.subr.mxu0 0.0
    %498 = vmatpush2.msra.mxu0 0.0
    %499 = vmatprep.subr.mxu0 0.0
    %500 = vmatpush2.msra.mxu0 0.0
    %501 = vmatprep.subr.mxu0 0.0
    %502 = vmatpush2.msra.mxu0 0.0
    %503 = vmatprep.subr.mxu0 0.0
    %504 = vmatpush2.msra.mxu0 0.0
    %505 = vmatprep.mubr.f32.mxu0 0.0
    %v506 = vand.u32 %v34, 4294901760
    %507 = vmatmul.mubr.f32.gmra.mxu0 %v506
    %v508 = vpop.f32.mrf.mxu0
    %v509 = vadd.f32 %v435, %v508
    %v510 = vpop.f32.mrf.mxu0
    %511 = vdwg.mxu0
    %v512 = vmax.f32 %v509, 0.0
    %v513 = vld [vmem:[%s3] sm:$0xff]
    %v514 = vld [vmem:[%s3 + $0x8] sm:$0xff]
    %v515 = vld [vmem:[%s3 + $0x10] sm:$0xff]
    %v516 = vld [vmem:[%s3 + $0x18] sm:$0xff]
    %v517 = vld [vmem:[%s3 + $0x20] sm:$0xff]
    %v518 = vld [vmem:[%s3 + $0x28] sm:$0xff]
    %v519 = vld [vmem:[%s3 + $0x30] sm:$0xff]
    %v520 = vld [vmem:[%s3 + $0x38] sm:$0xff]
    %v521 = vld [vmem:[%s3 + $0x40] sm:$0xff]
    %v522 = vld [vmem:[%s3 + $0x48] sm:$0xff]
    %v523 = vld [vmem:[%s3 + $0x50] sm:$0xff]
    %v524 = vld [vmem:[%s3 + $0x58] sm:$0xff]
    %v525 = vld [vmem:[%s3 + $0x60] sm:$0xff]
    %v526 = vld [vmem:[%s3 + $0x68] sm:$0xff]
    %v527 = vld [vmem:[%s3 + $0x70] sm:$0xff]
    %v528 = vld [vmem:[%s3 + $0x78] sm:$0xff]
    %v529 = vld [vmem:[%s4] sm:$0x1]
    %v531 = vlaneseq
    %v532 = vshrl.u32 %v531, 7
    %v533 = vsub.s32 0, %v532
    %v534 = vrot.slane %v529, %v533
    %536 = vmatprep.subr.mxu0 0.0
    %v537 = vand.u32 %v528, 4294901760
    %538 = vmatpush1.msra.mxu0 %v537
    %539 = vmatprep.subr.mxu0 0.0
    %v540 = vand.u32 %v527, 4294901760
    %541 = vmatpush1.msra.mxu0 %v540
    %542 = vmatprep.subr.mxu0 0.0
    %v543 = vand.u32 %v526, 4294901760
    %544 = vmatpush1.msra.mxu0 %v543
    %545 = vmatprep.subr.mxu0 0.0
    %v546 = vand.u32 %v525, 4294901760
    %547 = vmatpush1.msra.mxu0 %v546
    %548 = vmatprep.subr.mxu0 0.0
    %v549 = vand.u32 %v524, 4294901760
    %550 = vmatpush1.msra.mxu0 %v549
    %551 = vmatprep.subr.mxu0 0.0
    %v552 = vand.u32 %v523, 4294901760
    %553 = vmatpush1.msra.mxu0 %v552
    %554 = vmatprep.subr.mxu0 0.0
    %v555 = vand.u32 %v522, 4294901760
    %556 = vmatpush1.msra.mxu0 %v555
    %557 = vmatprep.subr.mxu0 0.0
    %v558 = vand.u32 %v521, 4294901760
    %559 = vmatpush1.msra.mxu0 %v558
    %560 = vmatprep.subr.mxu0 0.0
    %v561 = vand.u32 %v520, 4294901760
    %562 = vmatpush1.msra.mxu0 %v561
    %563 = vmatprep.subr.mxu0 0.0
    %v564 = vand.u32 %v519, 4294901760
    %565 = vmatpush1.msra.mxu0 %v564
    %566 = vmatprep.subr.mxu0 0.0
    %v567 = vand.u32 %v518, 4294901760
    %568 = vmatpush1.msra.mxu0 %v567
    %569 = vmatprep.subr.mxu0 0.0
    %v570 = vand.u32 %v517, 4294901760
    %571 = vmatpush1.msra.mxu0 %v570
    %572 = vmatprep.subr.mxu0 0.0
    %v573 = vand.u32 %v516, 4294901760
    %574 = vmatpush1.msra.mxu0 %v573
    %575 = vmatprep.subr.mxu0 0.0
    %v576 = vand.u32 %v515, 4294901760
    %577 = vmatpush1.msra.mxu0 %v576
    %578 = vmatprep.subr.mxu0 0.0
    %v579 = vand.u32 %v514, 4294901760
    %580 = vmatpush1.msra.mxu0 %v579
    %581 = vmatprep.subr.mxu0 0.0
    %v582 = vand.u32 %v513, 4294901760
    %583 = vmatpush1.msra.mxu0 %v582
    %584 = vmatprep.subr.mxu0 0.0
    %585 = vmatpush2.msra.mxu0 0.0
    %586 = vmatprep.subr.mxu0 0.0
    %587 = vmatpush2.msra.mxu0 0.0
    %588 = vmatprep.subr.mxu0 0.0
    %589 = vmatpush2.msra.mxu0 0.0
    %590 = vmatprep.subr.mxu0 0.0
    %591 = vmatpush2.msra.mxu0 0.0
    %592 = vmatprep.subr.mxu0 0.0
    %593 = vmatpush2.msra.mxu0 0.0
    %594 = vmatprep.subr.mxu0 0.0
    %595 = vmatpush2.msra.mxu0 0.0
    %596 = vmatprep.subr.mxu0 0.0
    %597 = vmatpush2.msra.mxu0 0.0
    %598 = vmatprep.subr.mxu0 0.0
    %599 = vmatpush2.msra.mxu0 0.0
    %600 = vmatprep.subr.mxu0 0.0
    %601 = vmatpush2.msra.mxu0 0.0
    %602 = vmatprep.subr.mxu0 0.0
    %603 = vmatpush2.msra.mxu0 0.0
    %604 = vmatprep.subr.mxu0 0.0
    %605 = vmatpush2.msra.mxu0 0.0
    %606 = vmatprep.subr.mxu0 0.0
    %607 = vmatpush2.msra.mxu0 0.0
    %608 = vmatprep.subr.mxu0 0.0
    %609 = vmatpush2.msra.mxu0 0.0
    %610 = vmatprep.subr.mxu0 0.0
    %611 = vmatpush2.msra.mxu0 0.0
    %612 = vmatprep.subr.mxu0 0.0
    %613 = vmatpush2.msra.mxu0 0.0
    %614 = vmatprep.subr.mxu0 0.0
    %615 = vmatpush2.msra.mxu0 0.0
    %616 = vmatprep.mubr.f32.mxu0 0.0
    %v617 = vand.u32 %v512, 4294901760
    %v618 = vsub.f32 %v512, %v617
    %v619 = vand.u32 %v618, 4294901760
    %v620 = vsub.f32 %v618, %v619
    %v621 = vand.u32 %v620, 4294901760
    %622 = vmatmul.mubr.f32.gmra.mxu0 %v621
    %v623 = vpop.f32.mrf.mxu0
    %v624 = vadd.f32 %v534, %v623
    %v625 = vpop.f32.mrf.mxu0
    %626 = vdwg.mxu0
    %627 = vmatprep.subr.mxu0 0.0
    %v628 = vand.u32 %v528, 4294901760
    %v629 = vsub.f32 %v528, %v628
    %v630 = vand.u32 %v629, 4294901760
    %v631 = vsub.f32 %v629, %v630
    %v632 = vand.u32 %v631, 4294901760
    %633 = vmatpush1.msra.mxu0 %v632
    %634 = vmatprep.subr.mxu0 0.0
    %v635 = vand.u32 %v527, 4294901760
    %v636 = vsub.f32 %v527, %v635
    %v637 = vand.u32 %v636, 4294901760
    %v638 = vsub.f32 %v636, %v637
    %v639 = vand.u32 %v638, 4294901760
    %640 = vmatpush1.msra.mxu0 %v639
    %641 = vmatprep.subr.mxu0 0.0
    %v642 = vand.u32 %v526, 4294901760
    %v643 = vsub.f32 %v526, %v642
    %v644 = vand.u32 %v643, 4294901760
    %v645 = vsub.f32 %v643, %v644
    %v646 = vand.u32 %v645, 4294901760
    %647 = vmatpush1.msra.mxu0 %v646
    %648 = vmatprep.subr.mxu0 0.0
    %v649 = vand.u32 %v525, 4294901760
    %v650 = vsub.f32 %v525, %v649
    %v651 = vand.u32 %v650, 4294901760
    %v652 = vsub.f32 %v650, %v651
    %v653 = vand.u32 %v652, 4294901760
    %654 = vmatpush1.msra.mxu0 %v653
    %655 = vmatprep.subr.mxu0 0.0
    %v656 = vand.u32 %v524, 4294901760
    %v657 = vsub.f32 %v524, %v656
    %v658 = vand.u32 %v657, 4294901760
    %v659 = vsub.f32 %v657, %v658
    %v660 = vand.u32 %v659, 4294901760
    %661 = vmatpush1.msra.mxu0 %v660
    %662 = vmatprep.subr.mxu0 0.0
    %v663 = vand.u32 %v523, 4294901760
    %v664 = vsub.f32 %v523, %v663
    %v665 = vand.u32 %v664, 4294901760
    %v666 = vsub.f32 %v664, %v665
    %v667 = vand.u32 %v666, 4294901760
    %668 = vmatpush1.msra.mxu0 %v667
    %669 = vmatprep.subr.mxu0 0.0
    %v670 = vand.u32 %v522, 4294901760
    %v671 = vsub.f32 %v522, %v670
    %v672 = vand.u32 %v671, 4294901760
    %v673 = vsub.f32 %v671, %v672
    %v674 = vand.u32 %v673, 4294901760
    %675 = vmatpush1.msra.mxu0 %v674
    %676 = vmatprep.subr.mxu0 0.0
    %v677 = vand.u32 %v521, 4294901760
    %v678 = vsub.f32 %v521, %v677
    %v679 = vand.u32 %v678, 4294901760
    %v680 = vsub.f32 %v678, %v679
    %v681 = vand.u32 %v680, 4294901760
    %682 = vmatpush1.msra.mxu0 %v681
    %683 = vmatprep.subr.mxu0 0.0
    %v684 = vand.u32 %v520, 4294901760
    %v685 = vsub.f32 %v520, %v684
    %v686 = vand.u32 %v685, 4294901760
    %v687 = vsub.f32 %v685, %v686
    %v688 = vand.u32 %v687, 4294901760
    %689 = vmatpush1.msra.mxu0 %v688
    %690 = vmatprep.subr.mxu0 0.0
    %v691 = vand.u32 %v519, 4294901760
    %v692 = vsub.f32 %v519, %v691
    %v693 = vand.u32 %v692, 4294901760
    %v694 = vsub.f32 %v692, %v693
    %v695 = vand.u32 %v694, 4294901760
    %696 = vmatpush1.msra.mxu0 %v695
    %697 = vmatprep.subr.mxu0 0.0
    %v698 = vand.u32 %v518, 4294901760
    %v699 = vsub.f32 %v518, %v698
    %v700 = vand.u32 %v699, 4294901760
    %v701 = vsub.f32 %v699, %v700
    %v702 = vand.u32 %v701, 4294901760
    %703 = vmatpush1.msra.mxu0 %v702
    %704 = vmatprep.subr.mxu0 0.0
    %v705 = vand.u32 %v517, 4294901760
    %v706 = vsub.f32 %v517, %v705
    %v707 = vand.u32 %v706, 4294901760
    %v708 = vsub.f32 %v706, %v707
    %v709 = vand.u32 %v708, 4294901760
    %710 = vmatpush1.msra.mxu0 %v709
    %711 = vmatprep.subr.mxu0 0.0
    %v712 = vand.u32 %v516, 4294901760
    %v713 = vsub.f32 %v516, %v712
    %v714 = vand.u32 %v713, 4294901760
    %v715 = vsub.f32 %v713, %v714
    %v716 = vand.u32 %v715, 4294901760
    %717 = vmatpush1.msra.mxu0 %v716
    %718 = vmatprep.subr.mxu0 0.0
    %v719 = vand.u32 %v515, 4294901760
    %v720 = vsub.f32 %v515, %v719
    %v721 = vand.u32 %v720, 4294901760
    %v722 = vsub.f32 %v720, %v721
    %v723 = vand.u32 %v722, 4294901760
    %724 = vmatpush1.msra.mxu0 %v723
    %725 = vmatprep.subr.mxu0 0.0
    %v726 = vand.u32 %v514, 4294901760
    %v727 = vsub.f32 %v514, %v726
    %v728 = vand.u32 %v727, 4294901760
    %v729 = vsub.f32 %v727, %v728
    %v730 = vand.u32 %v729, 4294901760
    %731 = vmatpush1.msra.mxu0 %v730
    %732 = vmatprep.subr.mxu0 0.0
    %v733 = vand.u32 %v513, 4294901760
    %v734 = vsub.f32 %v513, %v733
    %v735 = vand.u32 %v734, 4294901760
    %v736 = vsub.f32 %v734, %v735
    %v737 = vand.u32 %v736, 4294901760
    %738 = vmatpush1.msra.mxu0 %v737
    %739 = vmatprep.subr.mxu0 0.0
    %740 = vmatpush2.msra.mxu0 0.0
    %741 = vmatprep.subr.mxu0 0.0
    %742 = vmatpush2.msra.mxu0 0.0
    %743 = vmatprep.subr.mxu0 0.0
    %744 = vmatpush2.msra.mxu0 0.0
    %745 = vmatprep.subr.mxu0 0.0
    %746 = vmatpush2.msra.mxu0 0.0
    %747 = vmatprep.subr.mxu0 0.0
    %748 = vmatpush2.msra.mxu0 0.0
    %749 = vmatprep.subr.mxu0 0.0
    %750 = vmatpush2.msra.mxu0 0.0
    %751 = vmatprep.subr.mxu0 0.0
    %752 = vmatpush2.msra.mxu0 0.0
    %753 = vmatprep.subr.mxu0 0.0
    %754 = vmatpush2.msra.mxu0 0.0
    %755 = vmatprep.subr.mxu0 0.0
    %756 = vmatpush2.msra.mxu0 0.0
    %757 = vmatprep.subr.mxu0 0.0
    %758 = vmatpush2.msra.mxu0 0.0
    %759 = vmatprep.subr.mxu0 0.0
    %760 = vmatpush2.msra.mxu0 0.0
    %761 = vmatprep.subr.mxu0 0.0
    %762 = vmatpush2.msra.mxu0 0.0
    %763 = vmatprep.subr.mxu0 0.0
    %764 = vmatpush2.msra.mxu0 0.0
    %765 = vmatprep.subr.mxu0 0.0
    %766 = vmatpush2.msra.mxu0 0.0
    %767 = vmatprep.subr.mxu0 0.0
    %768 = vmatpush2.msra.mxu0 0.0
    %769 = vmatprep.subr.mxu0 0.0
    %770 = vmatpush2.msra.mxu0 0.0
    %771 = vmatprep.mubr.f32.mxu0 0.0
    %v772 = vand.u32 %v512, 4294901760
    %773 = vmatmul.mubr.f32.gmra.mxu0 %v772
    %v774 = vpop.f32.mrf.mxu0
    %v775 = vadd.f32 %v624, %v774
    %v776 = vpop.f32.mrf.mxu0
    %777 = vdwg.mxu0
    %778 = vmatprep.subr.mxu0 0.0
    %v779 = vand.u32 %v528, 4294901760
    %v780 = vsub.f32 %v528, %v779
    %781 = vmatpush1.msra.mxu0 %v780
    %782 = vmatprep.subr.mxu0 0.0
    %v783 = vand.u32 %v527, 4294901760
    %v784 = vsub.f32 %v527, %v783
    %785 = vmatpush1.msra.mxu0 %v784
    %786 = vmatprep.subr.mxu0 0.0
    %v787 = vand.u32 %v526, 4294901760
    %v788 = vsub.f32 %v526, %v787
    %789 = vmatpush1.msra.mxu0 %v788
    %790 = vmatprep.subr.mxu0 0.0
    %v791 = vand.u32 %v525, 4294901760
    %v792 = vsub.f32 %v525, %v791
    %793 = vmatpush1.msra.mxu0 %v792
    %794 = vmatprep.subr.mxu0 0.0
    %v795 = vand.u32 %v524, 4294901760
    %v796 = vsub.f32 %v524, %v795
    %797 = vmatpush1.msra.mxu0 %v796
    %798 = vmatprep.subr.mxu0 0.0
    %v799 = vand.u32 %v523, 4294901760
    %v800 = vsub.f32 %v523, %v799
    %801 = vmatpush1.msra.mxu0 %v800
    %802 = vmatprep.subr.mxu0 0.0
    %v803 = vand.u32 %v522, 4294901760
    %v804 = vsub.f32 %v522, %v803
    %805 = vmatpush1.msra.mxu0 %v804
    %806 = vmatprep.subr.mxu0 0.0
    %v807 = vand.u32 %v521, 4294901760
    %v808 = vsub.f32 %v521, %v807
    %809 = vmatpush1.msra.mxu0 %v808
    %810 = vmatprep.subr.mxu0 0.0
    %v811 = vand.u32 %v520, 4294901760
    %v812 = vsub.f32 %v520, %v811
    %813 = vmatpush1.msra.mxu0 %v812
    %814 = vmatprep.subr.mxu0 0.0
    %v815 = vand.u32 %v519, 4294901760
    %v816 = vsub.f32 %v519, %v815
    %817 = vmatpush1.msra.mxu0 %v816
    %818 = vmatprep.subr.mxu0 0.0
    %v819 = vand.u32 %v518, 4294901760
    %v820 = vsub.f32 %v518, %v819
    %821 = vmatpush1.msra.mxu0 %v820
    %822 = vmatprep.subr.mxu0 0.0
    %v823 = vand.u32 %v517, 4294901760
    %v824 = vsub.f32 %v517, %v823
    %825 = vmatpush1.msra.mxu0 %v824
    %826 = vmatprep.subr.mxu0 0.0
    %v827 = vand.u32 %v516, 4294901760
    %v828 = vsub.f32 %v516, %v827
    %829 = vmatpush1.msra.mxu0 %v828
    %830 = vmatprep.subr.mxu0 0.0
    %v831 = vand.u32 %v515, 4294901760
    %v832 = vsub.f32 %v515, %v831
    %833 = vmatpush1.msra.mxu0 %v832
    %834 = vmatprep.subr.mxu0 0.0
    %v835 = vand.u32 %v514, 4294901760
    %v836 = vsub.f32 %v514, %v835
    %837 = vmatpush1.msra.mxu0 %v836
    %838 = vmatprep.subr.mxu0 0.0
    %v839 = vand.u32 %v513, 4294901760
    %v840 = vsub.f32 %v513, %v839
    %841 = vmatpush1.msra.mxu0 %v840
    %842 = vmatprep.subr.mxu0 0.0
    %843 = vmatpush2.msra.mxu0 0.0
    %844 = vmatprep.subr.mxu0 0.0
    %845 = vmatpush2.msra.mxu0 0.0
    %846 = vmatprep.subr.mxu0 0.0
    %847 = vmatpush2.msra.mxu0 0.0
    %848 = vmatprep.subr.mxu0 0.0
    %849 = vmatpush2.msra.mxu0 0.0
    %850 = vmatprep.subr.mxu0 0.0
    %851 = vmatpush2.msra.mxu0 0.0
    %852 = vmatprep.subr.mxu0 0.0
    %853 = vmatpush2.msra.mxu0 0.0
    %854 = vmatprep.subr.mxu0 0.0
    %855 = vmatpush2.msra.mxu0 0.0
    %856 = vmatprep.subr.mxu0 0.0
    %857 = vmatpush2.msra.mxu0 0.0
    %858 = vmatprep.subr.mxu0 0.0
    %859 = vmatpush2.msra.mxu0 0.0
    %860 = vmatprep.subr.mxu0 0.0
    %861 = vmatpush2.msra.mxu0 0.0
    %862 = vmatprep.subr.mxu0 0.0
    %863 = vmatpush2.msra.mxu0 0.0
    %864 = vmatprep.subr.mxu0 0.0
    %865 = vmatpush2.msra.mxu0 0.0
    %866 = vmatprep.subr.mxu0 0.0
    %867 = vmatpush2.msra.mxu0 0.0
    %868 = vmatprep.subr.mxu0 0.0
    %869 = vmatpush2.msra.mxu0 0.0
    %870 = vmatprep.subr.mxu0 0.0
    %871 = vmatpush2.msra.mxu0 0.0
    %872 = vmatprep.subr.mxu0 0.0
    %873 = vmatpush2.msra.mxu0 0.0
    %874 = vmatprep.mubr.f32.mxu0 0.0
    %v875 = vand.u32 %v512, 4294901760
    %v876 = vsub.f32 %v512, %v875
    %877 = vmatmul.mubr.f32.gmra.mxu0 %v876
    %v878 = vpop.f32.mrf.mxu0
    %v879 = vadd.f32 %v775, %v878
    %v880 = vpop.f32.mrf.mxu0
    %881 = vdwg.mxu0
    %882 = vmatprep.subr.mxu0 0.0
    %v883 = vand.u32 %v528, 4294901760
    %884 = vmatpush1.msra.mxu0 %v883
    %885 = vmatprep.subr.mxu0 0.0
    %v886 = vand.u32 %v527, 4294901760
    %887 = vmatpush1.msra.mxu0 %v886
    %888 = vmatprep.subr.mxu0 0.0
    %v889 = vand.u32 %v526, 4294901760
    %890 = vmatpush1.msra.mxu0 %v889
    %891 = vmatprep.subr.mxu0 0.0
    %v892 = vand.u32 %v525, 4294901760
    %893 = vmatpush1.msra.mxu0 %v892
    %894 = vmatprep.subr.mxu0 0.0
    %v895 = vand.u32 %v524, 4294901760
    %896 = vmatpush1.msra.mxu0 %v895
    %897 = vmatprep.subr.mxu0 0.0
    %v898 = vand.u32 %v523, 4294901760
    %899 = vmatpush1.msra.mxu0 %v898
    %900 = vmatprep.subr.mxu0 0.0
    %v901 = vand.u32 %v522, 4294901760
    %902 = vmatpush1.msra.mxu0 %v901
    %903 = vmatprep.subr.mxu0 0.0
    %v904 = vand.u32 %v521, 4294901760
    %905 = vmatpush1.msra.mxu0 %v904
    %906 = vmatprep.subr.mxu0 0.0
    %v907 = vand.u32 %v520, 4294901760
    %908 = vmatpush1.msra.mxu0 %v907
    %909 = vmatprep.subr.mxu0 0.0
    %v910 = vand.u32 %v519, 4294901760
    %911 = vmatpush1.msra.mxu0 %v910
    %912 = vmatprep.subr.mxu0 0.0
    %v913 = vand.u32 %v518, 4294901760
    %914 = vmatpush1.msra.mxu0 %v913
    %915 = vmatprep.subr.mxu0 0.0
    %v916 = vand.u32 %v517, 4294901760
    %917 = vmatpush1.msra.mxu0 %v916
    %918 = vmatprep.subr.mxu0 0.0
    %v919 = vand.u32 %v516, 4294901760
    %920 = vmatpush1.msra.mxu0 %v919
    %921 = vmatprep.subr.mxu0 0.0
    %v922 = vand.u32 %v515, 4294901760
    %923 = vmatpush1.msra.mxu0 %v922
    %924 = vmatprep.subr.mxu0 0.0
    %v925 = vand.u32 %v514, 4294901760
    %926 = vmatpush1.msra.mxu0 %v925
    %927 = vmatprep.subr.mxu0 0.0
    %v928 = vand.u32 %v513, 4294901760
    %929 = vmatpush1.msra.mxu0 %v928
    %930 = vmatprep.subr.mxu0 0.0
    %931 = vmatpush2.msra.mxu0 0.0
    %932 = vmatprep.subr.mxu0 0.0
    %933 = vmatpush2.msra.mxu0 0.0
    %934 = vmatprep.subr.mxu0 0.0
    %935 = vmatpush2.msra.mxu0 0.0
    %936 = vmatprep.subr.mxu0 0.0
    %937 = vmatpush2.msra.mxu0 0.0
    %938 = vmatprep.subr.mxu0 0.0
    %939 = vmatpush2.msra.mxu0 0.0
    %940 = vmatprep.subr.mxu0 0.0
    %941 = vmatpush2.msra.mxu0 0.0
    %942 = vmatprep.subr.mxu0 0.0
    %943 = vmatpush2.msra.mxu0 0.0
    %944 = vmatprep.subr.mxu0 0.0
    %945 = vmatpush2.msra.mxu0 0.0
    %946 = vmatprep.subr.mxu0 0.0
    %947 = vmatpush2.msra.mxu0 0.0
    %948 = vmatprep.subr.mxu0 0.0
    %949 = vmatpush2.msra.mxu0 0.0
    %950 = vmatprep.subr.mxu0 0.0
    %951 = vmatpush2.msra.mxu0 0.0
    %952 = vmatprep.subr.mxu0 0.0
    %953 = vmatpush2.msra.mxu0 0.0
    %954 = vmatprep.subr.mxu0 0.0
    %955 = vmatpush2.msra.mxu0 0.0
    %956 = vmatprep.subr.mxu0 0.0
    %957 = vmatpush2.msra.mxu0 0.0
    %958 = vmatprep.subr.mxu0 0.0
    %959 = vmatpush2.msra.mxu0 0.0
    %960 = vmatprep.subr.mxu0 0.0
    %961 = vmatpush2.msra.mxu0 0.0
    %962 = vmatprep.mubr.f32.mxu0 0.0
    %v963 = vand.u32 %v512, 4294901760
    %v964 = vsub.f32 %v512, %v963
    %v965 = vand.u32 %v964, 4294901760
    %966 = vmatmul.mubr.f32.gmra.mxu0 %v965
    %v967 = vpop.f32.mrf.mxu0
    %v968 = vadd.f32 %v879, %v967
    %v969 = vpop.f32.mrf.mxu0
    %970 = vdwg.mxu0
    %971 = vmatprep.subr.mxu0 0.0
    %v972 = vand.u32 %v528, 4294901760
    %v973 = vsub.f32 %v528, %v972
    %v974 = vand.u32 %v973, 4294901760
    %975 = vmatpush1.msra.mxu0 %v974
    %976 = vmatprep.subr.mxu0 0.0
    %v977 = vand.u32 %v527, 4294901760
    %v978 = vsub.f32 %v527, %v977
    %v979 = vand.u32 %v978, 4294901760
    %980 = vmatpush1.msra.mxu0 %v979
    %981 = vmatprep.subr.mxu0 0.0
    %v982 = vand.u32 %v526, 4294901760
    %v983 = vsub.f32 %v526, %v982
    %v984 = vand.u32 %v983, 4294901760
    %985 = vmatpush1.msra.mxu0 %v984
    %986 = vmatprep.subr.mxu0 0.0
    %v987 = vand.u32 %v525, 4294901760
    %v988 = vsub.f32 %v525, %v987
    %v989 = vand.u32 %v988, 4294901760
    %990 = vmatpush1.msra.mxu0 %v989
    %991 = vmatprep.subr.mxu0 0.0
    %v992 = vand.u32 %v524, 4294901760
    %v993 = vsub.f32 %v524, %v992
    %v994 = vand.u32 %v993, 4294901760
    %995 = vmatpush1.msra.mxu0 %v994
    %996 = vmatprep.subr.mxu0 0.0
    %v997 = vand.u32 %v523, 4294901760
    %v998 = vsub.f32 %v523, %v997
    %v999 = vand.u32 %v998, 4294901760
    %1000 = vmatpush1.msra.mxu0 %v999
    %1001 = vmatprep.subr.mxu0 0.0
    %v1002 = vand.u32 %v522, 4294901760
    %v1003 = vsub.f32 %v522, %v1002
    %v1004 = vand.u32 %v1003, 4294901760
    %1005 = vmatpush1.msra.mxu0 %v1004
    %1006 = vmatprep.subr.mxu0 0.0
    %v1007 = vand.u32 %v521, 4294901760
    %v1008 = vsub.f32 %v521, %v1007
    %v1009 = vand.u32 %v1008, 4294901760
    %1010 = vmatpush1.msra.mxu0 %v1009
    %1011 = vmatprep.subr.mxu0 0.0
    %v1012 = vand.u32 %v520, 4294901760
    %v1013 = vsub.f32 %v520, %v1012
    %v1014 = vand.u32 %v1013, 4294901760
    %1015 = vmatpush1.msra.mxu0 %v1014
    %1016 = vmatprep.subr.mxu0 0.0
    %v1017 = vand.u32 %v519, 4294901760
    %v1018 = vsub.f32 %v519, %v1017
    %v1019 = vand.u32 %v1018, 4294901760
    %1020 = vmatpush1.msra.mxu0 %v1019
    %1021 = vmatprep.subr.mxu0 0.0
    %v1022 = vand.u32 %v518, 4294901760
    %v1023 = vsub.f32 %v518, %v1022
    %v1024 = vand.u32 %v1023, 4294901760
    %1025 = vmatpush1.msra.mxu0 %v1024
    %1026 = vmatprep.subr.mxu0 0.0
    %v1027 = vand.u32 %v517, 4294901760
    %v1028 = vsub.f32 %v517, %v1027
    %v1029 = vand.u32 %v1028, 4294901760
    %1030 = vmatpush1.msra.mxu0 %v1029
    %1031 = vmatprep.subr.mxu0 0.0
    %v1032 = vand.u32 %v516, 4294901760
    %v1033 = vsub.f32 %v516, %v1032
    %v1034 = vand.u32 %v1033, 4294901760
    %1035 = vmatpush1.msra.mxu0 %v1034
    %1036 = vmatprep.subr.mxu0 0.0
    %v1037 = vand.u32 %v515, 4294901760
    %v1038 = vsub.f32 %v515, %v1037
    %v1039 = vand.u32 %v1038, 4294901760
    %1040 = vmatpush1.msra.mxu0 %v1039
    %1041 = vmatprep.subr.mxu0 0.0
    %v1042 = vand.u32 %v514, 4294901760
    %v1043 = vsub.f32 %v514, %v1042
    %v1044 = vand.u32 %v1043, 4294901760
    %1045 = vmatpush1.msra.mxu0 %v1044
    %1046 = vmatprep.subr.mxu0 0.0
    %v1047 = vand.u32 %v513, 4294901760
    %v1048 = vsub.f32 %v513, %v1047
    %v1049 = vand.u32 %v1048, 4294901760
    %1050 = vmatpush1.msra.mxu0 %v1049
    %1051 = vmatprep.subr.mxu0 0.0
    %1052 = vmatpush2.msra.mxu0 0.0
    %1053 = vmatprep.subr.mxu0 0.0
    %1054 = vmatpush2.msra.mxu0 0.0
    %1055 = vmatprep.subr.mxu0 0.0
    %1056 = vmatpush2.msra.mxu0 0.0
    %1057 = vmatprep.subr.mxu0 0.0
    %1058 = vmatpush2.msra.mxu0 0.0
    %1059 = vmatprep.subr.mxu0 0.0
    %1060 = vmatpush2.msra.mxu0 0.0
    %1061 = vmatprep.subr.mxu0 0.0
    %1062 = vmatpush2.msra.mxu0 0.0
    %1063 = vmatprep.subr.mxu0 0.0
    %1064 = vmatpush2.msra.mxu0 0.0
    %1065 = vmatprep.subr.mxu0 0.0
    %1066 = vmatpush2.msra.mxu0 0.0
    %1067 = vmatprep.subr.mxu0 0.0
    %1068 = vmatpush2.msra.mxu0 0.0
    %1069 = vmatprep.subr.mxu0 0.0
    %1070 = vmatpush2.msra.mxu0 0.0
    %1071 = vmatprep.subr.mxu0 0.0
    %1072 = vmatpush2.msra.mxu0 0.0
    %1073 = vmatprep.subr.mxu0 0.0
    %1074 = vmatpush2.msra.mxu0 0.0
    %1075 = vmatprep.subr.mxu0 0.0
    %1076 = vmatpush2.msra.mxu0 0.0
    %1077 = vmatprep.subr.mxu0 0.0
    %1078 = vmatpush2.msra.mxu0 0.0
    %1079 = vmatprep.subr.mxu0 0.0
    %1080 = vmatpush2.msra.mxu0 0.0
    %1081 = vmatprep.subr.mxu0 0.0
    %1082 = vmatpush2.msra.mxu0 0.0
    %1083 = vmatprep.mubr.f32.mxu0 0.0
    %v1084 = vand.u32 %v512, 4294901760
    %1085 = vmatmul.mubr.f32.gmra.mxu0 %v1084
    %v1086 = vpop.f32.mrf.mxu0
    %v1087 = vadd.f32 %v968, %v1086
    %v1088 = vpop.f32.mrf.mxu0
    %1089 = vdwg.mxu0
    %1090 = vmatprep.subr.mxu0 0.0
    %v1091 = vand.u32 %v528, 4294901760
    %1092 = vmatpush1.msra.mxu0 %v1091
    %1093 = vmatprep.subr.mxu0 0.0
    %v1094 = vand.u32 %v527, 4294901760
    %1095 = vmatpush1.msra.mxu0 %v1094
    %1096 = vmatprep.subr.mxu0 0.0
    %v1097 = vand.u32 %v526, 4294901760
    %1098 = vmatpush1.msra.mxu0 %v1097
    %1099 = vmatprep.subr.mxu0 0.0
    %v1100 = vand.u32 %v525, 4294901760
    %1101 = vmatpush1.msra.mxu0 %v1100
    %1102 = vmatprep.subr.mxu0 0.0
    %v1103 = vand.u32 %v524, 4294901760
    %1104 = vmatpush1.msra.mxu0 %v1103
    %1105 = vmatprep.subr.mxu0 0.0
    %v1106 = vand.u32 %v523, 4294901760
    %1107 = vmatpush1.msra.mxu0 %v1106
    %1108 = vmatprep.subr.mxu0 0.0
    %v1109 = vand.u32 %v522, 4294901760
    %1110 = vmatpush1.msra.mxu0 %v1109
    %1111 = vmatprep.subr.mxu0 0.0
    %v1112 = vand.u32 %v521, 4294901760
    %1113 = vmatpush1.msra.mxu0 %v1112
    %1114 = vmatprep.subr.mxu0 0.0
    %v1115 = vand.u32 %v520, 4294901760
    %1116 = vmatpush1.msra.mxu0 %v1115
    %1117 = vmatprep.subr.mxu0 0.0
    %v1118 = vand.u32 %v519, 4294901760
    %1119 = vmatpush1.msra.mxu0 %v1118
    %1120 = vmatprep.subr.mxu0 0.0
    %v1121 = vand.u32 %v518, 4294901760
    %1122 = vmatpush1.msra.mxu0 %v1121
    %1123 = vmatprep.subr.mxu0 0.0
    %v1124 = vand.u32 %v517, 4294901760
    %1125 = vmatpush1.msra.mxu0 %v1124
    %1126 = vmatprep.subr.mxu0 0.0
    %v1127 = vand.u32 %v516, 4294901760
    %1128 = vmatpush1.msra.mxu0 %v1127
    %1129 = vmatprep.subr.mxu0 0.0
    %v1130 = vand.u32 %v515, 4294901760
    %1131 = vmatpush1.msra.mxu0 %v1130
    %1132 = vmatprep.subr.mxu0 0.0
    %v1133 = vand.u32 %v514, 4294901760
    %1134 = vmatpush1.msra.mxu0 %v1133
    %1135 = vmatprep.subr.mxu0 0.0
    %v1136 = vand.u32 %v513, 4294901760
    %1137 = vmatpush1.msra.mxu0 %v1136
    %1138 = vmatprep.subr.mxu0 0.0
    %1139 = vmatpush2.msra.mxu0 0.0
    %1140 = vmatprep.subr.mxu0 0.0
    %1141 = vmatpush2.msra.mxu0 0.0
    %1142 = vmatprep.subr.mxu0 0.0
    %1143 = vmatpush2.msra.mxu0 0.0
    %1144 = vmatprep.subr.mxu0 0.0
    %1145 = vmatpush2.msra.mxu0 0.0
    %1146 = vmatprep.subr.mxu0 0.0
    %1147 = vmatpush2.msra.mxu0 0.0
    %1148 = vmatprep.subr.mxu0 0.0
    %1149 = vmatpush2.msra.mxu0 0.0
    %1150 = vmatprep.subr.mxu0 0.0
    %1151 = vmatpush2.msra.mxu0 0.0
    %1152 = vmatprep.subr.mxu0 0.0
    %1153 = vmatpush2.msra.mxu0 0.0
    %1154 = vmatprep.subr.mxu0 0.0
    %1155 = vmatpush2.msra.mxu0 0.0
    %1156 = vmatprep.subr.mxu0 0.0
    %1157 = vmatpush2.msra.mxu0 0.0
    %1158 = vmatprep.subr.mxu0 0.0
    %1159 = vmatpush2.msra.mxu0 0.0
    %1160 = vmatprep.subr.mxu0 0.0
    %1161 = vmatpush2.msra.mxu0 0.0
    %1162 = vmatprep.subr.mxu0 0.0
    %1163 = vmatpush2.msra.mxu0 0.0
    %1164 = vmatprep.subr.mxu0 0.0
    %1165 = vmatpush2.msra.mxu0 0.0
    %1166 = vmatprep.subr.mxu0 0.0
    %1167 = vmatpush2.msra.mxu0 0.0
    %1168 = vmatprep.subr.mxu0 0.0
    %1169 = vmatpush2.msra.mxu0 0.0
    %1170 = vmatprep.mubr.f32.mxu0 0.0
    %v1171 = vand.u32 %v512, 4294901760
    %1172 = vmatmul.mubr.f32.gmra.mxu0 %v1171
    %v1173 = vpop.f32.mrf.mxu0
    %v1174 = vadd.f32 %v1087, %v1173
    %v1175 = vpop.f32.mrf.mxu0
    %1176 = vdwg.mxu0
    %v1177 = vmax.f32 %v1174, 0.0
    %vm1178 = vcmask 130048
    %1179 = vst.msk [vmem:[#allocation2] sm:$0xff] %vm1178, %v1177
    // Predicated region
    $region22: #{_forward.1} parent=1 // pred_check
      _
    $region23: #{_forward.1} parent=1 // pred_check_branch
      %1181 = sbr.rel (0) target = $region25
    $region24: #{_forward.1} parent=1 // pred_region
      %s1183 = ssub.s32 128, 128
      %1184 = vsyncadd [#allocation3], %s1183
      %s1186 = sshll.u32 [#allocation2], 4
      %s1187 = int_to_ptr.vmem [resolvable:$true] %s1186
      %1189 = dma.vmem_to_hbm [thread:$0]  %s1187, 128, %s5, [#allocation3]
    $region25: #{_forward.1} parent=1 // pred_fallthru
      _
    // Predicated region
    $region26: #{_forward.1} parent=1 // pred_check
      _
    $region27: #{_forward.1} parent=1 // pred_check_branch
      %1191 = sbr.rel (0) target = $region29
    $region28: #{_forward.1} parent=1 // pred_region
      %1192 = dma.done [#allocation3], 128
    $region29: #{_forward.1} parent=1 // pred_fallthru
      _
    %1193 = vsyncpa [#allocation3], 1

</llo_original>
